<compile_context>
chip_gen: v5e
topology: v5e:2x2
jax: 0.10.0
libtpu: 0.0.40
codegen_flags: <defaults>
</compile_context>

<pallas_src>
import functools

import jax
import jax.numpy as jnp
from jax.experimental import pallas as pl
from jax.experimental.pallas import tpu as pltpu


_LANES = 512        # lane-dense tile width (multiple of 128)
_BLOCK_ROWS = 1024  # rows per grid step (multiple of 8); 2 MiB per f32 operand block


def _l1l2_partial_kernel(x_ref, y_ref, abs_ref, sq_ref):
    """One grid step: accumulate per-lane partial sums of |d| and d^2."""
    @pl.when(pl.program_id(0) == 0)
    def _init():
        abs_ref[...] = jnp.zeros_like(abs_ref)
        sq_ref[...] = jnp.zeros_like(sq_ref)

    d = x_ref[...].astype(jnp.float32) - y_ref[...].astype(jnp.float32)
    abs_ref[...] += jnp.sum(jnp.abs(d), axis=0, keepdims=True)
    sq_ref[...] += jnp.sum(d * d, axis=0, keepdims=True)


def _flatten_pad(x, rows, cols):
    """Flatten x and zero-pad to (rows, cols). Zero padding on BOTH operands
    makes diff == 0 there, contributing nothing to either sum."""
    n = x.size
    flat = x.reshape(-1)
    pad = rows * cols - n
    if pad:
        flat = jnp.pad(flat, (0, pad))
    return flat.reshape(rows, cols)


def _partial_sums(x, y):
    """Returns (sum(|x - y|), sum((x - y)^2)) as f32 scalars via a single
    pipelined Pallas reduction pass."""
    n = x.size
    cols = _LANES
    rows = pl.cdiv(n, cols)
    if rows <= _BLOCK_ROWS:
        rows_p = max(8, ((rows + 7) // 8) * 8)       # single full-array block
        block_rows = rows_p
    else:
        rows_p = ((rows + _BLOCK_ROWS - 1) // _BLOCK_ROWS) * _BLOCK_ROWS
        block_rows = _BLOCK_ROWS

    xp = _flatten_pad(x, rows_p, cols)
    yp = _flatten_pad(y, rows_p, cols)
    grid = (rows_p // block_rows,)

    abs_p, sq_p = pl.pallas_call(
        _l1l2_partial_kernel,
        out_shape=(jax.ShapeDtypeStruct((1, cols), jnp.float32),
                   jax.ShapeDtypeStruct((1, cols), jnp.float32)),
        grid_spec=pltpu.PrefetchScalarGridSpec(
            num_scalar_prefetch=0,
            grid=grid,
            in_specs=[pl.BlockSpec((block_rows, cols), lambda i: (i, 0)),
                      pl.BlockSpec((block_rows, cols), lambda i: (i, 0))],
            out_specs=[pl.BlockSpec((1, cols), lambda i: (0, 0)),
                       pl.BlockSpec((1, cols), lambda i: (0, 0))],
        ),
        compiler_params=pltpu.CompilerParams(
            dimension_semantics=("arbitrary",)),
    )(xp, yp)
    return jnp.sum(abs_p), jnp.sum(sq_p)


@functools.partial(jax.jit, static_argnames=("lambda_l1", "lambda_l2"))
def combined_l1_l2_loss(inp, target, lambda_l1=1.0, lambda_l2=1.0):
    """CombinedL1L2Loss.forward: lambda_l1 * L1Loss + lambda_l2 * MSELoss
    (both with 'mean' reduction, like the PyTorch defaults)."""
    assert inp.shape == target.shape, (inp.shape, target.shape)
    n = inp.size
    abs_sum, sq_sum = _partial_sums(inp, target)
    inv_n = jnp.float32(1.0 / n)
    return (jnp.float32(lambda_l1) * abs_sum * inv_n
            + jnp.float32(lambda_l2) * sq_sum * inv_n)


if __name__ == "__main__":
    key = jax.random.PRNGKey(0)
    k1, k2, k3, k4 = jax.random.split(key, 4)

    # Small case (single-block grid).
    shape = (2, 4, 16, 16)
    x = jax.random.normal(k1, shape, jnp.float32)
    y = jax.random.normal(k2, shape, jnp.float32)
    loss = jax.block_until_ready(combined_l1_l2_loss(x, y, lambda_l1=1.0, lambda_l2=1.0))
    d = x - y
    ref = 1.0 * jnp.mean(jnp.abs(d)) + 1.0 * jnp.mean(d * d)
    assert loss.shape == ()
    assert bool(jnp.isfinite(loss))
    assert bool(jnp.allclose(loss, ref, rtol=1e-5, atol=1e-6)), (loss, ref)

    # Larger case that exercises the multi-step reduction grid + accumulator.
    shape2 = (4, 16, 128, 128)
    x2 = jax.random.normal(k3, shape2, jnp.float32)
    y2 = jax.random.normal(k4, shape2, jnp.float32)
    loss2 = jax.block_until_ready(combined_l1_l2_loss(x2, y2, lambda_l1=0.7, lambda_l2=1.3))
    d2 = x2 - y2
    ref2 = 0.7 * jnp.mean(jnp.abs(d2)) + 1.3 * jnp.mean(d2 * d2)
    assert bool(jnp.allclose(loss2, ref2, rtol=1e-5, atol=1e-6)), (loss2, ref2)

    print("KERNEL_OK")
</pallas_src>

<mosaic_0001>
module attributes {stable_mosaic.version = 11 : i64} {
  func.func @_l1l2_partial_kernel(%arg0: i32, %arg1: memref<8x512xf32, #tpu.memory_space<vmem>>, %arg2: memref<8x512xf32, #tpu.memory_space<vmem>>, %arg3: memref<1x512xf32, #tpu.memory_space<vmem>>, %arg4: memref<1x512xf32, #tpu.memory_space<vmem>>) attributes {dimension_semantics = [#tpu.dimension_semantics<arbitrary>], iteration_bounds = array<i64: 1>, scalar_prefetch = 0 : i64, scratch_operands = 0 : i64, tpu.core_type = #tpu.core_type<tc>, window_params = [{transform_indices = @transform_0, window_bounds = array<i64: 8, 512>}, {transform_indices = @transform_1, window_bounds = array<i64: 8, 512>}, {pipeline_mode = #tpu.pipeline_mode<synchronous>, transform_indices = @transform_2, window_bounds = array<i64: 1, 512>}, {pipeline_mode = #tpu.pipeline_mode<synchronous>, transform_indices = @transform_3, window_bounds = array<i64: 1, 512>}]} {
    %c0_i32 = arith.constant 0 : i32
    %0 = arith.cmpi eq, %arg0, %c0_i32 : i32
    %1 = arith.extui %0 : i1 to i32
    %c0_i32_0 = arith.constant 0 : i32
    %2 = arith.cmpi ne, %1, %c0_i32_0 : i32
    scf.if %2 {
      %cst_13 = arith.constant 0.000000e+00 : f32
      %18 = vector.broadcast %cst_13 : f32 to vector<1x512xf32>
      %c0_14 = arith.constant 0 : index
      %c0_15 = arith.constant 0 : index
      %19 = vector.load %arg3[%c0_14, %c0_15] : memref<1x512xf32, #tpu.memory_space<vmem>>, vector<1x512xf32>
      tpu.vector_store %arg3[%c0_14, %c0_15], %18 {strides = array<i32>} : memref<1x512xf32, #tpu.memory_space<vmem>>, vector<1x512xf32>,
      %cst_16 = arith.constant 0.000000e+00 : f32
      %20 = vector.broadcast %cst_16 : f32 to vector<1x512xf32>
      %c0_17 = arith.constant 0 : index
      %c0_18 = arith.constant 0 : index
      %21 = vector.load %arg4[%c0_17, %c0_18] : memref<1x512xf32, #tpu.memory_space<vmem>>, vector<1x512xf32>
      tpu.vector_store %arg4[%c0_17, %c0_18], %20 {strides = array<i32>} : memref<1x512xf32, #tpu.memory_space<vmem>>, vector<1x512xf32>,
    } else {
    }
    %c0 = arith.constant 0 : index
    %c0_1 = arith.constant 0 : index
    %3 = vector.load %arg1[%c0, %c0_1] : memref<8x512xf32, #tpu.memory_space<vmem>>, vector<8x512xf32>
    %c0_2 = arith.constant 0 : index
    %c0_3 = arith.constant 0 : index
    %4 = vector.load %arg2[%c0_2, %c0_3] : memref<8x512xf32, #tpu.memory_space<vmem>>, vector<8x512xf32>
    %5 = arith.subf %3, %4 : vector<8x512xf32>
    %c0_4 = arith.constant 0 : index
    %c0_5 = arith.constant 0 : index
    %6 = vector.load %arg3[%c0_4, %c0_5] : memref<1x512xf32, #tpu.memory_space<vmem>>, vector<1x512xf32>
    %7 = math.absf %5 : vector<8x512xf32>
    %cst = arith.constant dense<0.000000e+00> : vector<512xf32>
    %8 = vector.multi_reduction <add>, %7, %cst [0] : vector<8x512xf32> to vector<512xf32>
    %9 = vector.shape_cast %8 : vector<512xf32> to vector<1x512xf32>
    %10 = arith.addf %6, %9 : vector<1x512xf32>
    %c0_6 = arith.constant 0 : index
    %c0_7 = arith.constant 0 : index
    %11 = vector.load %arg3[%c0_6, %c0_7] : memref<1x512xf32, #tpu.memory_space<vmem>>, vector<1x512xf32>
    tpu.vector_store %arg3[%c0_6, %c0_7], %10 {strides = array<i32>} : memref<1x512xf32, #tpu.memory_space<vmem>>, vector<1x512xf32>,
    %c0_8 = arith.constant 0 : index
    %c0_9 = arith.constant 0 : index
    %12 = vector.load %arg4[%c0_8, %c0_9] : memref<1x512xf32, #tpu.memory_space<vmem>>, vector<1x512xf32>
    %13 = arith.mulf %5, %5 : vector<8x512xf32>
    %cst_10 = arith.constant dense<0.000000e+00> : vector<512xf32>
    %14 = vector.multi_reduction <add>, %13, %cst_10 [0] : vector<8x512xf32> to vector<512xf32>
    %15 = vector.shape_cast %14 : vector<512xf32> to vector<1x512xf32>
    %16 = arith.addf %12, %15 : vector<1x512xf32>
    %c0_11 = arith.constant 0 : index
    %c0_12 = arith.constant 0 : index
    %17 = vector.load %arg4[%c0_11, %c0_12] : memref<1x512xf32, #tpu.memory_space<vmem>>, vector<1x512xf32>
    tpu.vector_store %arg4[%c0_11, %c0_12], %16 {strides = array<i32>} : memref<1x512xf32, #tpu.memory_space<vmem>>, vector<1x512xf32>,
    return
  }
  func.func @transform_0(%arg0: i32) -> (i32, i32) {
    %c0_i32 = arith.constant 0 : i32
    %c0_i32_0 = arith.constant 0 : i32
    return %arg0, %c0_i32 : i32, i32
  }
  func.func @transform_1(%arg0: i32) -> (i32, i32) {
    %c0_i32 = arith.constant 0 : i32
    %c0_i32_0 = arith.constant 0 : i32
    return %arg0, %c0_i32 : i32, i32
  }
  func.func @transform_2(%arg0: i32) -> (i32, i32) {
    %c0_i32 = arith.constant 0 : i32
    %c0_i32_0 = arith.constant 0 : i32
    %c0_i32_1 = arith.constant 0 : i32
    return %c0_i32, %c0_i32_0 : i32, i32
  }
  func.func @transform_3(%arg0: i32) -> (i32, i32) {
    %c0_i32 = arith.constant 0 : i32
    %c0_i32_0 = arith.constant 0 : i32
    %c0_i32_1 = arith.constant 0 : i32
    return %c0_i32, %c0_i32_0 : i32, i32
  }
}

</mosaic_0001>

<llo_original>
// kernel: combined_l1_l2_loss.1
$region0: #{combined_l1_l2_loss.1}
  #allocation0 [shape = 'u32[]', space=smem, size = 0x4, offset = 0x4, fixed_abs, tag = 'smem constant byte address 0x4 - core index']
  #allocation1 [shape = 'u32[72,128]{1,0:T(1,128)}', space=vmem, size = 0x9000, scoped, tag = 'internal scratch']
  %s0 = inlined_call_operand.vmem [shape: f32[8,512], index: 0, kind: input, shape index: {}]
  %s1 = inlined_call_operand.vmem [shape: f32[8,512], index: 1, kind: input, shape index: {}]
  %s2 = inlined_call_operand.vmem [shape: f32[1,512], index: 2, kind: output, shape index: {0}]
  %s3 = inlined_call_operand.vmem [shape: f32[1,512], index: 3, kind: output, shape index: {1}]
  %4 = xla_tuple %s2, %s3
  %s5 = sld [smem:[#allocation0]]
  $region30: #{combined_l1_l2_loss.1} parent=0
    _
  %s7 = ssub.s32 1, %s5
  %s8 = scalar_select 0, %s7, %s5
  // Predicated region
  $region2: #{combined_l1_l2_loss.1} parent=0 // pred_check
    _
  $region3: #{combined_l1_l2_loss.1} parent=0 // pred_check_branch
    %10 = sbr.rel (0) target = $region5
  $region4: #{combined_l1_l2_loss.1} parent=0 // pred_region
    _
  $region5: #{combined_l1_l2_loss.1} parent=0 // pred_fallthru
    _
  // Predicated region
  $region6: #{combined_l1_l2_loss.1} parent=0 // pred_check
    _
  $region7: #{combined_l1_l2_loss.1} parent=0 // pred_check_branch
    %12 = sbr.rel (0) target = $region9
  $region8: #{combined_l1_l2_loss.1} parent=0 // pred_region
    _
  $region9: #{combined_l1_l2_loss.1} parent=0 // pred_fallthru
    _
  %p13 = scmp.eq.s32.totalorder 0, 0
  // Predicated region
  $region10: #{combined_l1_l2_loss.1} parent=0 // pred_check
    %p14 = pneg %p13
  $region11: #{combined_l1_l2_loss.1} parent=0 // pred_check_branch
    %16 = sbr.rel (%p14) target = $region13
  $region12: #{combined_l1_l2_loss.1} parent=0 // pred_region
    %v17 = vlaneseq
    %vm18 = vcmp.ge.s32.totalorder %v17, 0
    %vm19 = vcmp.lt.s32.totalorder %v17, 512
    %vm20 = vmand %vm18, %vm19
    %21 = vst.msk [vmem:[%s2] sm:$0xf] %vm20, 0.0
    %22 = vst.msk [vmem:[%s3] sm:$0xf] %vm20, 0.0
  $region13: #{combined_l1_l2_loss.1} parent=0 // pred_fallthru
    _
  %v23 = vld [vmem:[%s0] sm:$0xff]
  %v24 = vld [vmem:[%s0 + $0x8] sm:$0xff]
  %v25 = vld [vmem:[%s0 + $0x10] sm:$0xff]
  %v26 = vld [vmem:[%s0 + $0x18] sm:$0xff]
  %v27 = vld [vmem:[%s1] sm:$0xff]
  %v28 = vld [vmem:[%s1 + $0x8] sm:$0xff]
  %v29 = vld [vmem:[%s1 + $0x10] sm:$0xff]
  %v30 = vld [vmem:[%s1 + $0x18] sm:$0xff]
  %v31 = vsub.f32 %v23, %v27
  %v32 = vsub.f32 %v24, %v28
  %v33 = vsub.f32 %v25, %v29
  %v34 = vsub.f32 %v26, %v30
  %v35 = vld [vmem:[%s2] sm:$0xf]
  %v36 = vand.u32 2147483647, %v31
  %v37 = vand.u32 2147483647, %v32
  %v38 = vand.u32 2147483647, %v33
  %v39 = vand.u32 2147483647, %v34
  %v40 = vrot.slane %v36, 4
  %v41 = vadd.f32 %v36, %v40
  %v42 = vrot.slane %v41, 2
  %v43 = vadd.f32 %v41, %v42
  %v44 = vrot.slane %v43, 1
  %v45 = vadd.f32 %v43, %v44
  %v46 = vrot.slane %v37, 4
  %v47 = vadd.f32 %v37, %v46
  %v48 = vrot.slane %v47, 2
  %v49 = vadd.f32 %v47, %v48
  %v50 = vrot.slane %v49, 1
  %v51 = vadd.f32 %v49, %v50
  %v52 = vrot.slane %v38, 4
  %v53 = vadd.f32 %v38, %v52
  %v54 = vrot.slane %v53, 2
  %v55 = vadd.f32 %v53, %v54
  %v56 = vrot.slane %v55, 1
  %v57 = vadd.f32 %v55, %v56
  %v58 = vrot.slane %v39, 4
  %v59 = vadd.f32 %v39, %v58
  %v60 = vrot.slane %v59, 2
  %v61 = vadd.f32 %v59, %v60
  %v62 = vrot.slane %v61, 1
  %v63 = vadd.f32 %v61, %v62
  %v68 = vrot.slane %v51, 7
  %v69 = vrot.slane %v57, 6
  %v70 = vrot.slane %v63, 5
  %vm71 = vcmask 1040384
  %v72 = vsel %vm71, %v45, %v68
  %vm73 = vcmask 1042434
  %v74 = vsel %vm73, %v69, %v70
  %vm75 = vcmask 1041408
  %v76 = vsel %vm75, %v72, %v74
  %v78 = vadd.f32 %v35, %v76
  %v79 = vlaneseq
  %vm80 = vcmp.ge.s32.totalorder %v79, 0
  %vm81 = vcmp.lt.s32.totalorder %v79, 512
  %vm82 = vmand %vm80, %vm81
  %83 = vst.msk [vmem:[%s2] sm:$0xf] %vm82, %v78
  %v84 = vld [vmem:[%s3] sm:$0xf]
  %v85 = vmul.f32 %v31, %v31
  %v86 = vmul.f32 %v32, %v32
  %v87 = vmul.f32 %v33, %v33
  %v88 = vmul.f32 %v34, %v34
  %v89 = vrot.slane %v85, 4
  %v90 = vadd.f32 %v85, %v89
  %v91 = vrot.slane %v90, 2
  %v92 = vadd.f32 %v90, %v91
  %v93 = vrot.slane %v92, 1
  %v94 = vadd.f32 %v92, %v93
  %v95 = vrot.slane %v86, 4
  %v96 = vadd.f32 %v86, %v95
  %v97 = vrot.slane %v96, 2
  %v98 = vadd.f32 %v96, %v97
  %v99 = vrot.slane %v98, 1
  %v100 = vadd.f32 %v98, %v99
  %v101 = vrot.slane %v87, 4
  %v102 = vadd.f32 %v87, %v101
  %v103 = vrot.slane %v102, 2
  %v104 = vadd.f32 %v102, %v103
  %v105 = vrot.slane %v104, 1
  %v106 = vadd.f32 %v104, %v105
  %v107 = vrot.slane %v88, 4
  %v108 = vadd.f32 %v88, %v107
  %v109 = vrot.slane %v108, 2
  %v110 = vadd.f32 %v108, %v109
  %v111 = vrot.slane %v110, 1
  %v112 = vadd.f32 %v110, %v111
  %v117 = vrot.slane %v100, 7
  %v118 = vrot.slane %v106, 6
  %v119 = vrot.slane %v112, 5
  %v120 = vsel %vm71, %v94, %v117
  %v121 = vsel %vm73, %v118, %v119
  %v122 = vsel %vm75, %v120, %v121
  %v124 = vadd.f32 %v84, %v122
  %125 = vst.msk [vmem:[%s3] sm:$0xf] %vm82, %v124
  // Predicated region
  $region14: #{combined_l1_l2_loss.1} parent=0 // pred_check
    _
  $region15: #{combined_l1_l2_loss.1} parent=0 // pred_check_branch
    %127 = sbr.rel (0) target = $region17
  $region16: #{combined_l1_l2_loss.1} parent=0 // pred_region
    _
  $region17: #{combined_l1_l2_loss.1} parent=0 // pred_fallthru
    _
  // Predicated region
  $region18: #{combined_l1_l2_loss.1} parent=0 // pred_check
    _
  $region19: #{combined_l1_l2_loss.1} parent=0 // pred_check_branch
    %129 = sbr.rel (0) target = $region21
  $region20: #{combined_l1_l2_loss.1} parent=0 // pred_region
    _
  $region21: #{combined_l1_l2_loss.1} parent=0 // pred_fallthru
    _
  // Predicated region
  $region22: #{combined_l1_l2_loss.1} parent=0 // pred_check
    _
  $region23: #{combined_l1_l2_loss.1} parent=0 // pred_check_branch
    %131 = sbr.rel (0) target = $region25
  $region24: #{combined_l1_l2_loss.1} parent=0 // pred_region
    _
  $region25: #{combined_l1_l2_loss.1} parent=0 // pred_fallthru
    _
  // Predicated region
  $region26: #{combined_l1_l2_loss.1} parent=0 // pred_check
    _
  $region27: #{combined_l1_l2_loss.1} parent=0 // pred_check_branch
    %133 = sbr.rel (0) target = $region29
  $region28: #{combined_l1_l2_loss.1} parent=0 // pred_region
    _
  $region29: #{combined_l1_l2_loss.1} parent=0 // pred_fallthru
    _

</llo_original>
